<compile_context>
chip_gen: v7x
topology: tpu7x:2x2x1
jax: 0.10.0
libtpu: 0.0.40
codegen_flags: <defaults>
</compile_context>

<pallas_src>
import jax
import jax.numpy as jnp
from jax.experimental import pallas as pl
from jax.experimental.pallas import tpu as pltpu


def _swish_kernel(x_ref, o_ref):
    # swish(x) = x * sigmoid(x) = 0.5 * x * (1 + tanh(0.5 * x)).
    # Single EUP transcendental; computed in f32 for accuracy, cast back.
    x = x_ref[...].astype(jnp.float32)
    o_ref[...] = (0.5 * x * (1.0 + jnp.tanh(0.5 * x))).astype(o_ref.dtype)


def _physical_vmem_bytes():
    """Best-effort physical VMEM size query; None if unavailable."""
    try:
        info = pltpu.get_tpu_info()
    except Exception:
        return None
    for name in ("vmem_capacity_bytes", "vmem_size_bytes", "vmem_bytes"):
        v = getattr(info, name, None)
        if isinstance(v, int) and v > 0:
            return v
    return None


def _target_block_bytes():
    """Per-generation block budget: large enough to amortize the ~0.35 us
    per-grid-step overhead, small enough that the 2x(in+out) double-buffered
    blocks stay comfortably under physical VMEM (64 MiB on v7x)."""
    vmem = _physical_vmem_bytes()
    if vmem is None:
        return 8 * 1024 * 1024
    return max(2 * 1024 * 1024, min(12 * 1024 * 1024, (vmem * 3 // 5) // 4))


def _choose_view(x):
    """Return (rows, lanes, pad) for a lane-dense 2-D view of x.

    Prefer a layout-preserving collapse of leading dims when the last dim is
    already a multiple of 128 (avoids a hidden HBM relayout); otherwise pick
    the widest 128-multiple lane count dividing the element count."""
    n = x.size
    itemsize = jnp.dtype(x.dtype).itemsize
    if (x.ndim >= 2 and x.shape[-1] % 128 == 0
            and x.shape[-1] * itemsize * 32 <= 4 * 1024 * 1024):
        lanes = x.shape[-1]
        return n // lanes, lanes, 0
    lanes = 128
    for cand in (1024, 512, 256, 128):
        if n % cand == 0:
            lanes = cand
            break
    n_pad = pl.cdiv(n, lanes) * lanes
    return n_pad // lanes, lanes, n_pad - n


def swish(x: jax.Array) -> jax.Array:
    """swish(x) = x * sigmoid(x), elementwise. Same shape/dtype as the input."""
    orig_shape = x.shape
    orig_dtype = x.dtype
    n = x.size
    if n == 0:
        return x

    itemsize = jnp.dtype(orig_dtype).itemsize
    # Sublane tile multiple for the second-to-last block dim
    # (f32: 8, bf16/f16: 16, int8/fp8: 32; other dtypes computed as-if f32).
    sublane = {4: 8, 2: 16, 1: 32}.get(itemsize, 8)

    rows, lanes, pad = _choose_view(x)
    if pad == 0:
        x2d = jnp.reshape(x, (rows, lanes))          # layout-preserving collapse
    else:
        # Ragged tail: pad < 128 elements; swish(0) == 0 so the pad is inert.
        x2d = jnp.reshape(jnp.pad(jnp.reshape(x, (-1,)), (0, pad)), (rows, lanes))

    row_bytes = lanes * itemsize
    target = _target_block_bytes()
    if rows <= sublane:
        block_rows = rows                            # tiny input: one full block
    else:
        max_rows = max(sublane, (target // row_bytes) // sublane * sublane)
        want_rows = pl.cdiv(pl.cdiv(rows, 2), sublane) * sublane  # >= 2 steps
        block_rows = min(max_rows, want_rows)
    grid_n = pl.cdiv(rows, block_rows)

    # Small odd grids leave one of v7x's two TensorCores idle on the last
    # step; shrink the block slightly so the step count is even (never grows
    # the block, so VMEM use cannot increase).
    if 3 <= grid_n <= 16 and grid_n % 2 == 1:
        cand = max(sublane, pl.cdiv(pl.cdiv(rows, grid_n + 1), sublane) * sublane)
        if pl.cdiv(rows, cand) % 2 == 0:
            block_rows, grid_n = cand, pl.cdiv(rows, cand)

    block_bytes = block_rows * row_bytes
    # in + out, double-buffered, plus margin for Mosaic internal scratch;
    # bounded by construction of `target` to stay under v7x's 64 MiB physical.
    vmem_limit = max(16 * 1024 * 1024,
                     min(4 * block_bytes + 8 * 1024 * 1024, 56 * 1024 * 1024))

    cost = pl.CostEstimate(
        flops=4 * n,
        transcendentals=n,
        bytes_accessed=2 * n * itemsize,
    )

    out2d = pl.pallas_call(
        _swish_kernel,
        out_shape=jax.ShapeDtypeStruct((rows, lanes), orig_dtype),
        grid_spec=pltpu.PrefetchScalarGridSpec(
            num_scalar_prefetch=0,
            grid=(grid_n,),
            in_specs=[pl.BlockSpec((block_rows, lanes), lambda i: (i, 0))],
            out_specs=pl.BlockSpec((block_rows, lanes), lambda i: (i, 0)),
        ),
        compiler_params=pltpu.CompilerParams(
            dimension_semantics=("parallel",),
            vmem_limit_bytes=vmem_limit,
        ),
        cost_estimate=cost,
    )(x2d)

    if pad:
        return jnp.reshape(jnp.reshape(out2d, (-1,))[:n], orig_shape)
    return jnp.reshape(out2d, orig_shape)


if __name__ == "__main__":
    key = jax.random.PRNGKey(0)

    # Small NCHW input consistent with the module's (N, *) contract.
    # Exercises the flatten path (last dim 16, total size divisible by 1024).
    x = jax.random.normal(key, (2, 4, 16, 16), dtype=jnp.float32)
    out = jax.block_until_ready(swish(x))
    ref = x * jax.nn.sigmoid(x)
    assert out.shape == x.shape and out.dtype == x.dtype
    assert jnp.allclose(out, ref, atol=1e-5, rtol=1e-5)

    # Ragged shape exercises the tiny tail-pad / masked path.
    x2 = jax.random.normal(jax.random.PRNGKey(1), (2, 4, 7, 9), dtype=jnp.float32)
    out2 = jax.block_until_ready(swish(x2))
    ref2 = x2 * jax.nn.sigmoid(x2)
    assert out2.shape == x2.shape and out2.dtype == x2.dtype
    assert jnp.allclose(out2, ref2, atol=1e-5, rtol=1e-5)

    # 128-aligned last dim exercises the layout-preserving (no-relayout) path.
    x3 = jax.random.normal(jax.random.PRNGKey(2), (2, 8, 256), dtype=jnp.float32)
    out3 = jax.block_until_ready(swish(x3))
    ref3 = x3 * jax.nn.sigmoid(x3)
    assert out3.shape == x3.shape and out3.dtype == x3.dtype
    assert jnp.allclose(out3, ref3, atol=1e-5, rtol=1e-5)

    print("KERNEL_OK")
</pallas_src>

<mosaic_0001>
module attributes {stable_mosaic.version = 11 : i64} {
  func.func @_swish_kernel(%arg0: i32, %arg1: memref<2x1024xf32, #tpu.memory_space<vmem>>, %arg2: memref<2x1024xf32, #tpu.memory_space<vmem>>) attributes {dimension_semantics = [#tpu.dimension_semantics<parallel>], iteration_bounds = array<i64: 1>, scalar_prefetch = 0 : i64, scratch_operands = 0 : i64, tpu.core_type = #tpu.core_type<tc>, window_params = [{transform_indices = @transform_0, window_bounds = array<i64: 2, 1024>}, {transform_indices = @transform_1, window_bounds = array<i64: 2, 1024>}]} {
    %c0 = arith.constant 0 : index
    %c0_0 = arith.constant 0 : index
    %0 = vector.load %arg1[%c0, %c0_0] : memref<2x1024xf32, #tpu.memory_space<vmem>>, vector<2x1024xf32>
    %cst = arith.constant 5.000000e-01 : f32
    %1 = vector.broadcast %cst : f32 to vector<2x1024xf32>
    %2 = arith.mulf %1, %0 : vector<2x1024xf32>
    %cst_1 = arith.constant 5.000000e-01 : f32
    %3 = vector.broadcast %cst_1 : f32 to vector<2x1024xf32>
    %4 = arith.mulf %3, %0 : vector<2x1024xf32>
    %5 = math.tanh %4 : vector<2x1024xf32>
    %cst_2 = arith.constant 1.000000e+00 : f32
    %6 = vector.broadcast %cst_2 : f32 to vector<2x1024xf32>
    %7 = arith.addf %6, %5 : vector<2x1024xf32>
    %8 = arith.mulf %2, %7 : vector<2x1024xf32>
    %c0_3 = arith.constant 0 : index
    %c0_4 = arith.constant 0 : index
    %9 = vector.load %arg2[%c0_3, %c0_4] : memref<2x1024xf32, #tpu.memory_space<vmem>>, vector<2x1024xf32>
    tpu.vector_store %arg2[%c0_3, %c0_4], %8 {strides = array<i32>} : memref<2x1024xf32, #tpu.memory_space<vmem>>, vector<2x1024xf32>,
    return
  }
  func.func @transform_0(%arg0: i32) -> (i32, i32) {
    %c0_i32 = arith.constant 0 : i32
    %c0_i32_0 = arith.constant 0 : i32
    return %arg0, %c0_i32 : i32, i32
  }
  func.func @transform_1(%arg0: i32) -> (i32, i32) {
    %c0_i32 = arith.constant 0 : i32
    %c0_i32_0 = arith.constant 0 : i32
    return %arg0, %c0_i32 : i32, i32
  }
}

</mosaic_0001>

<llo_original>
// kernel: tpu_custom_call.1
$region0: #{tpu_custom_call.1}
  #allocation0 [shape = 'u32[]', space=smem, size = 0x4, offset = 0x4, fixed_abs, tag = 'smem constant byte address 0x4 - core index']
  #allocation1 [shape = 'u32[144,128]{1,0:T(1,128)}', space=vmem, size = 0x12000, scoped, tag = 'internal scratch']
  %s0 = inlined_call_operand.hbm [shape: f32[2,1024], index: 0, kind: input, shape index: {}]
  %s1 = inlined_call_operand.hbm [shape: f32[2,1024], index: 1, kind: output, shape index: {}]
  %s2 = sld [smem:[#allocation0]]
  $region18: #{tpu_custom_call.1} parent=0
    _
  %s4 = ssub.s32 1, %s2
  %s5 = scalar_select 0, %s4, %s2
  $region1: #{tpu_custom_call.1} parent=0
    #allocation2 [shape = 'u8[8192]{0}', space=vmem, size = 0x2000, scoped, tag = 'input window, operand 0, single buffered']
    #allocation3 [shape = 's32[1]{0}', space=sflag, size = 0x4, scoped, tag = 'scoped memory for tpu_custom_call.1']
    #allocation4 [shape = 's32[1]{0}', space=sflag, size = 0x4, scoped, tag = 'scoped memory for tpu_custom_call.1']
    #allocation5 [shape = 'u8[8192]{0}', space=vmem, size = 0x2000, scoped, tag = 'output window, operand 0, single buffered']
    %6 = vsyncpa [#allocation3], 0
    %7 = vsyncpa [#allocation4], 0
    // Predicated region
    $region2: #{tpu_custom_call.1} parent=1 // pred_check
      _
    $region3: #{tpu_custom_call.1} parent=1 // pred_check_branch
      %9 = sbr.rel (0) target = $region5
    $region4: #{tpu_custom_call.1} parent=1 // pred_region
      %s11 = ssub.s32 256, 256
      %12 = vsyncadd [#allocation3], %s11
      %s14 = sshll.u32 [#allocation2], 4
      %s15 = int_to_ptr.vmem [resolvable:$true] %s14
      %17 = dma.hbm_to_vmem [thread:$0]  %s0, 256, %s15, [#allocation3]
    $region5: #{tpu_custom_call.1} parent=1 // pred_fallthru
      _
    // Predicated region
    $region6: #{tpu_custom_call.1} parent=1 // pred_check
      _
    $region7: #{tpu_custom_call.1} parent=1 // pred_check_branch
      %19 = sbr.rel (0) target = $region9
    $region8: #{tpu_custom_call.1} parent=1 // pred_region
      %20 = dma.done [#allocation3], 256
    $region9: #{tpu_custom_call.1} parent=1 // pred_fallthru
      _
    %v21 = vld [vmem:[#allocation2] sm:$0xff]
    %v22 = vld [vmem:[#allocation2 + $0x8] sm:$0xff]
    %v23 = vmul.f32 %v21, 0.5
    %v24 = vmul.f32 %v22, 0.5
    %v25 = vtanh.pop %v23
    %v26 = vtanh.pop %v24
    %v27 = vadd.f32 %v25, 1.0
    %v28 = vadd.f32 %v26, 1.0
    %v29 = vmul.f32 %v23, %v27
    %v30 = vmul.f32 %v24, %v28
    %31 = vst [vmem:[#allocation5] sm:$0xff] %v29
    %32 = vst [vmem:[#allocation5 + $0x8] sm:$0xff] %v30
    // Predicated region
    $region10: #{tpu_custom_call.1} parent=1 // pred_check
      _
    $region11: #{tpu_custom_call.1} parent=1 // pred_check_branch
      %34 = sbr.rel (0) target = $region13
    $region12: #{tpu_custom_call.1} parent=1 // pred_region
      %s36 = ssub.s32 256, 256
      %37 = vsyncadd [#allocation4], %s36
      %s39 = sshll.u32 [#allocation5], 4
      %s40 = int_to_ptr.vmem [resolvable:$true] %s39
      %42 = dma.vmem_to_hbm [thread:$0]  %s40, 256, %s1, [#allocation4]
    $region13: #{tpu_custom_call.1} parent=1 // pred_fallthru
      _
    // Predicated region
    $region14: #{tpu_custom_call.1} parent=1 // pred_check
      _
    $region15: #{tpu_custom_call.1} parent=1 // pred_check_branch
      %44 = sbr.rel (0) target = $region17
    $region16: #{tpu_custom_call.1} parent=1 // pred_region
      %45 = dma.done [#allocation4], 256
    $region17: #{tpu_custom_call.1} parent=1 // pred_fallthru
      _
    %46 = vsyncpa [#allocation3], 1
    %47 = vsyncpa [#allocation4], 1

</llo_original>
